<compile_context>
chip_gen: v6e
topology: v6e:2x2x1
jax: 0.10.0
libtpu: 0.0.40
codegen_flags: <defaults>
</compile_context>

<pallas_src>
import functools

import jax
import jax.numpy as jnp
from jax import lax
from jax.experimental import pallas as pl
from jax.experimental.pallas import tpu as pltpu


def _weight_norm(v, g):
    """PyTorch weight_norm (dim=0): W[o, :] = g[o] * v[o, :] / ||v[o, :]||."""
    norm = jnp.sqrt(jnp.sum(v * v, axis=1, keepdims=True))
    return v * (g[:, None] / norm)


def fuse_watermark_params(emb_table, w1, b1, w2, b2):
    """Fold embedding + linear1 + linear2 into one padded weight/bias.

    Call ONCE at init (not in the per-step hot path).
      w1: (64, 128)  already weight-normed, laid out (in, out)
      w2: (128, 512) already weight-normed, laid out (in, out)
    Returns (w_pad (Kpad, 512) f32, b_fused (1, 512) f32, S, V).
    """
    V, E = emb_table.shape
    S = w1.shape[0] // E
    N = w2.shape[1]
    hi = jax.lax.Precision.HIGHEST

    # kron(I_S, emb): block-diagonal embedding, so onehot @ emb_block == embed+reshape.
    emb_block = jnp.kron(jnp.eye(S, dtype=jnp.float32), emb_table)            # (S*V, S*E)
    w_fused = jnp.dot(jnp.dot(emb_block, w1, precision=hi), w2, precision=hi)  # (S*V, N)
    b_fused = (jnp.dot(b1, w2, precision=hi) + b2)[None, :]                    # (1, N)

    # Zero-pad the contraction dim up to a multiple of 128: lane-dense MXU operands,
    # and the in-kernel one-hot never fires on the padded columns (slots < S*V).
    k = S * V
    kpad = max(128, -(-k // 128) * 128)
    w_pad = jnp.zeros((kpad, N), jnp.float32).at[:k].set(w_fused)
    return w_pad, b_fused, S, V


def _encoder_kernel(idx_ref, w_ref, b_ref, o_ref, *, S, V):
    # One-hot built in-kernel from the raw indices: iota + compare on the VPU.
    # Flattened slot for (row b, position p) is p*V + idx[b, p]; slots are disjoint.
    idx = idx_ref[...]                                             # (B, S) int32
    B = o_ref.shape[0]
    kpad = w_ref.shape[0]
    col = lax.broadcasted_iota(jnp.int32, (B, kpad), 1)            # (B, Kpad)
    onehot = jnp.zeros((B, kpad), jnp.float32)
    for p in range(S):                                             # S=4, static unroll
        onehot += (col == (idx[:, p:p + 1] + p * V)).astype(jnp.float32)
    # Single lane-dense MXU matmul, f32 accumulator written straight to the
    # f32 output with exactly one VPU epilogue op (the bias add).
    o_ref[...] = jnp.dot(onehot, w_ref[...],
                         preferred_element_type=jnp.float32) + b_ref[...]


def watermark_encoder(indices, w_pad, b_fused, S, V):
    """indices: (B, S) int32 in [0, V).  Returns (B, 512) float32."""
    B = indices.shape[0]
    N = w_pad.shape[1]
    kernel = functools.partial(_encoder_kernel, S=S, V=V)
    vmem = pl.BlockSpec(memory_space=pltpu.MemorySpace.VMEM)
    # B is tiny (latency-bound): no grid.  If B ever scales into the thousands,
    # add grid=(cdiv(B, TB),) with index_map lambda i: (0, 0) on w_pad/b_fused
    # (weights stay resident) and dimension_semantics=("parallel",).
    return pl.pallas_call(
        kernel,
        out_shape=jax.ShapeDtypeStruct((B, N), jnp.float32),
        in_specs=[vmem, vmem, vmem],
        out_specs=vmem,
    )(indices.astype(jnp.int32), w_pad, b_fused)


def _reference(indices, emb_table, w1, b1, w2, b2):
    hi = jax.lax.Precision.HIGHEST
    x_e = emb_table[indices]                      # (B, 4, 16)
    x = x_e.reshape(x_e.shape[0], -1)             # (B, 64)
    x = jnp.dot(x, w1, precision=hi) + b1
    x = jnp.dot(x, w2, precision=hi) + b2
    return x


if __name__ == "__main__":
    key = jax.random.PRNGKey(0)
    k_idx, k_emb, k_v1, k_g1, k_b1, k_v2, k_g2, k_b2 = jax.random.split(key, 8)

    B, S, V, E = 8, 4, 16, 16      # in_features = S*E = 64

    # Input token indices.
    indices = jax.random.randint(k_idx, (B, S), 0, V, dtype=jnp.int32)

    # Deterministic parameter init (synthetic, not a checkpoint).
    emb_table = jax.random.normal(k_emb, (V, E), dtype=jnp.float32) * 0.1

    v1 = jax.random.normal(k_v1, (128, 64), dtype=jnp.float32) * 0.1   # (out, in)
    g1 = jax.random.uniform(k_g1, (128,), dtype=jnp.float32, minval=0.5, maxval=1.5)
    b1 = jax.random.normal(k_b1, (128,), dtype=jnp.float32) * 0.1

    v2 = jax.random.normal(k_v2, (512, 128), dtype=jnp.float32) * 0.1  # (out, in)
    g2 = jax.random.uniform(k_g2, (512,), dtype=jnp.float32, minval=0.5, maxval=1.5)
    b2 = jax.random.normal(k_b2, (512,), dtype=jnp.float32) * 0.1

    # weight_norm materialized, then transposed to (in, out) for y = x @ W + b.
    w1 = _weight_norm(v1, g1).T   # (64, 128)
    w2 = _weight_norm(v2, g2).T   # (128, 512)

    # One-time algebraic fusion of embedding + both linears.
    w_pad, b_fused, S_, V_ = fuse_watermark_params(emb_table, w1, b1, w2, b2)

    out = watermark_encoder(indices, w_pad, b_fused, S_, V_)
    jax.block_until_ready(out)

    ref = _reference(indices, emb_table, w1, b1, w2, b2)
    assert out.shape == (B, 512)
    assert jnp.allclose(out, ref, atol=2e-4, rtol=2e-4)

    print("KERNEL_OK")
</pallas_src>

<mosaic_0001>
module attributes {stable_mosaic.version = 11 : i64} {
  func.func @_encoder_kernel(%arg0: memref<8x4xi32, #tpu.memory_space<vmem>>, %arg1: memref<128x512xf32, #tpu.memory_space<vmem>>, %arg2: memref<1x512xf32, #tpu.memory_space<vmem>>, %arg3: memref<8x512xf32, #tpu.memory_space<vmem>>) attributes {dimension_semantics = [], scalar_prefetch = 0 : i64, scratch_operands = 0 : i64, tpu.core_type = #tpu.core_type<tc>} {
    %c0 = arith.constant 0 : index
    %c0_0 = arith.constant 0 : index
    %0 = vector.load %arg0[%c0, %c0_0] : memref<8x4xi32, #tpu.memory_space<vmem>>, vector<8x4xi32>
    %1 = tpu.iota {dimensions = array<i32: 1>} : vector<8x128xi32>
    %cst = arith.constant 0.000000e+00 : f32
    %2 = vector.broadcast %cst : f32 to vector<8x128xf32>
    %3 = vector.extract_strided_slice %0 {offsets = [0, 0], sizes = [8, 1], strides = [1, 1]} : vector<8x4xi32> to vector<8x1xi32>
    %c0_i32 = arith.constant 0 : i32
    %4 = vector.broadcast %c0_i32 : i32 to vector<8x1xi32>
    %5 = arith.addi %3, %4 : vector<8x1xi32>
    %6 = vector.broadcast %5 : vector<8x1xi32> to vector<8x128xi32>
    %7 = arith.cmpi eq, %1, %6 : vector<8x128xi32>
    %8 = arith.extui %7 : vector<8x128xi1> to vector<8x128xi32>
    %9 = arith.sitofp %8 : vector<8x128xi32> to vector<8x128xf32>
    %10 = arith.addf %2, %9 : vector<8x128xf32>
    %11 = vector.extract_strided_slice %0 {offsets = [0, 1], sizes = [8, 1], strides = [1, 1]} : vector<8x4xi32> to vector<8x1xi32>
    %c16_i32 = arith.constant 16 : i32
    %12 = vector.broadcast %c16_i32 : i32 to vector<8x1xi32>
    %13 = arith.addi %11, %12 : vector<8x1xi32>
    %14 = vector.broadcast %13 : vector<8x1xi32> to vector<8x128xi32>
    %15 = arith.cmpi eq, %1, %14 : vector<8x128xi32>
    %16 = arith.extui %15 : vector<8x128xi1> to vector<8x128xi32>
    %17 = arith.sitofp %16 : vector<8x128xi32> to vector<8x128xf32>
    %18 = arith.addf %10, %17 : vector<8x128xf32>
    %19 = vector.extract_strided_slice %0 {offsets = [0, 2], sizes = [8, 1], strides = [1, 1]} : vector<8x4xi32> to vector<8x1xi32>
    %c32_i32 = arith.constant 32 : i32
    %20 = vector.broadcast %c32_i32 : i32 to vector<8x1xi32>
    %21 = arith.addi %19, %20 : vector<8x1xi32>
    %22 = vector.broadcast %21 : vector<8x1xi32> to vector<8x128xi32>
    %23 = arith.cmpi eq, %1, %22 : vector<8x128xi32>
    %24 = arith.extui %23 : vector<8x128xi1> to vector<8x128xi32>
    %25 = arith.sitofp %24 : vector<8x128xi32> to vector<8x128xf32>
    %26 = arith.addf %18, %25 : vector<8x128xf32>
    %27 = vector.extract_strided_slice %0 {offsets = [0, 3], sizes = [8, 1], strides = [1, 1]} : vector<8x4xi32> to vector<8x1xi32>
    %c48_i32 = arith.constant 48 : i32
    %28 = vector.broadcast %c48_i32 : i32 to vector<8x1xi32>
    %29 = arith.addi %27, %28 : vector<8x1xi32>
    %30 = vector.broadcast %29 : vector<8x1xi32> to vector<8x128xi32>
    %31 = arith.cmpi eq, %1, %30 : vector<8x128xi32>
    %32 = arith.extui %31 : vector<8x128xi1> to vector<8x128xi32>
    %33 = arith.sitofp %32 : vector<8x128xi32> to vector<8x128xf32>
    %34 = arith.addf %26, %33 : vector<8x128xf32>
    %c0_1 = arith.constant 0 : index
    %c0_2 = arith.constant 0 : index
    %35 = vector.load %arg1[%c0_1, %c0_2] : memref<128x512xf32, #tpu.memory_space<vmem>>, vector<128x512xf32>
    %cst_3 = arith.constant dense<0.000000e+00> : vector<8x512xf32>
    %36 = tpu.matmul %34, %35, %cst_3 {dimension_numbers = #tpu.dot_dimension_numbers<[1], [0], [0], [1], [0, 0, 1, 1], [], []>} : vector<8x128xf32>, vector<128x512xf32>, vector<8x512xf32> -> vector<8x512xf32>
    %c0_4 = arith.constant 0 : index
    %c0_5 = arith.constant 0 : index
    %37 = vector.load %arg2[%c0_4, %c0_5] : memref<1x512xf32, #tpu.memory_space<vmem>>, vector<1x512xf32>
    %38 = vector.broadcast %37 : vector<1x512xf32> to vector<8x512xf32>
    %39 = arith.addf %36, %38 : vector<8x512xf32>
    %c0_6 = arith.constant 0 : index
    %c0_7 = arith.constant 0 : index
    %40 = vector.load %arg3[%c0_6, %c0_7] : memref<8x512xf32, #tpu.memory_space<vmem>>, vector<8x512xf32>
    tpu.vector_store %arg3[%c0_6, %c0_7], %39 {strides = array<i32>} : memref<8x512xf32, #tpu.memory_space<vmem>>, vector<8x512xf32>,
    return
  }
}

</mosaic_0001>

<llo_original>
// kernel: tpu_custom_call.1
$region0: #{tpu_custom_call.1}
  #allocation0 [shape = 'u32[]', space=smem, size = 0x4, offset = 0x4, fixed_abs, tag = 'smem constant byte address 0x4 - core index']
  #allocation1 [shape = 'u32[144,128]{1,0:T(1,128)}', space=vmem, size = 0x12000, scoped, tag = 'internal scratch']
  %s0 = inlined_call_operand.vmem [shape: s32[8,4], index: 0, kind: input, shape index: {}]
  %s1 = inlined_call_operand.hbm [shape: f32[128,512], index: 1, kind: input, shape index: {}]
  %s2 = inlined_call_operand.vmem [shape: f32[1,512], index: 2, kind: input, shape index: {}]
  %s3 = inlined_call_operand.hbm [shape: f32[8,512], index: 3, kind: output, shape index: {}]
  %s4 = sld [smem:[#allocation0]]
  $region26: #{tpu_custom_call.1} parent=0
    _
  %s6 = ssub.s32 1, %s4
  %s7 = scalar_select 0, %s6, %s4
  $region1: #{tpu_custom_call.1} parent=0
    #allocation2 [shape = 'u8[262144]{0}', space=vmem, size = 0x40000, scoped, tag = 'input window, operand 1, single buffered']
    #allocation3 [shape = 's32[1]{0}', space=sflag, size = 0x4, scoped, tag = 'scoped memory for tpu_custom_call.1']
    #allocation4 [shape = 's32[1]{0}', space=sflag, size = 0x4, scoped, tag = 'scoped memory for tpu_custom_call.1']
    #allocation5 [shape = 'u8[16384]{0}', space=vmem, size = 0x4000, scoped, tag = 'output window, operand 0, single buffered']
    %8 = vsyncpa [#allocation3], 0
    %9 = vsyncpa [#allocation4], 0
    // Predicated region
    $region2: #{tpu_custom_call.1} parent=1 // pred_check
      _
    $region3: #{tpu_custom_call.1} parent=1 // pred_check_branch
      %11 = sbr.rel (0) target = $region5
    $region4: #{tpu_custom_call.1} parent=1 // pred_region
      _
    $region5: #{tpu_custom_call.1} parent=1 // pred_fallthru
      _
    // Predicated region
    $region6: #{tpu_custom_call.1} parent=1 // pred_check
      _
    $region7: #{tpu_custom_call.1} parent=1 // pred_check_branch
      %13 = sbr.rel (0) target = $region9
    $region8: #{tpu_custom_call.1} parent=1 // pred_region
      %s15 = ssub.s32 8192, 8192
      %16 = vsyncadd [#allocation3], %s15
      %s17 = sshll.u32 [#allocation2], 4
      %s18 = int_to_ptr.vmem [resolvable:$true] %s17
      %23 = dma.hbm_to_vmem [thread:$0]  %s1, 8192, %s18, [#allocation3], 512, 512, 32
    $region9: #{tpu_custom_call.1} parent=1 // pred_fallthru
      _
    // Predicated region
    $region10: #{tpu_custom_call.1} parent=1 // pred_check
      _
    $region11: #{tpu_custom_call.1} parent=1 // pred_check_branch
      %25 = sbr.rel (0) target = $region13
    $region12: #{tpu_custom_call.1} parent=1 // pred_region
      _
    $region13: #{tpu_custom_call.1} parent=1 // pred_fallthru
      _
    // Predicated region
    $region14: #{tpu_custom_call.1} parent=1 // pred_check
      _
    $region15: #{tpu_custom_call.1} parent=1 // pred_check_branch
      %27 = sbr.rel (0) target = $region17
    $region16: #{tpu_custom_call.1} parent=1 // pred_region
      %28 = dma.done [#allocation3], 8192
    $region17: #{tpu_custom_call.1} parent=1 // pred_fallthru
      _
    %v29 = vld [vmem:[%s0] sm:$0xff]
    %v30 = vlaneseq
    %v31 = vand.u32 %v30, 127
    %32 = vset.pattern.permute.xlu0 0
    %33 = vperm.xlu0 %32, %v29
    %v34 = vpop.permute.xlu0 %33
    %vm35 = vcmp.eq.s32.totalorder %v31, %v34
    %v36 = vsel %vm35, 1, 0
    %v37 = vcvt.s32.f32 %v36
    %v38 = vadd.f32 %v37, 0.0
    %v39 = vadd.s32 %v29, 16
    %40 = vset.pattern.permute.xlu0 1
    %41 = vperm.xlu0 %40, %v39
    %v42 = vpop.permute.xlu0 %41
    %vm43 = vcmp.eq.s32.totalorder %v31, %v42
    %v44 = vsel %vm43, 1, 0
    %v45 = vcvt.s32.f32 %v44
    %v46 = vadd.f32 %v38, %v45
    %v47 = vadd.s32 %v29, 32
    %48 = vset.pattern.permute.xlu0 2
    %49 = vperm.xlu0 %48, %v47
    %v50 = vpop.permute.xlu0 %49
    %vm51 = vcmp.eq.s32.totalorder %v31, %v50
    %v52 = vsel %vm51, 1, 0
    %v53 = vcvt.s32.f32 %v52
    %v54 = vadd.f32 %v46, %v53
    %v55 = vadd.s32 %v29, 48
    %56 = vset.pattern.permute.xlu0 3
    %57 = vperm.xlu0 %56, %v55
    %v58 = vpop.permute.xlu0 %57
    %vm59 = vcmp.eq.s32.totalorder %v31, %v58
    %v60 = vsel %vm59, 1, 0
    %v61 = vcvt.s32.f32 %v60
    %v62 = vadd.f32 %v54, %v61
    %v63 = vld [vmem:[#allocation2] sm:$0xff]
    %v64 = vld [vmem:[#allocation2 + $0x8] sm:$0xff]
    %v65 = vld [vmem:[#allocation2 + $0x10] sm:$0xff]
    %v66 = vld [vmem:[#allocation2 + $0x18] sm:$0xff]
    %v67 = vld [vmem:[#allocation2 + $0x20] sm:$0xff]
    %v68 = vld [vmem:[#allocation2 + $0x28] sm:$0xff]
    %v69 = vld [vmem:[#allocation2 + $0x30] sm:$0xff]
    %v70 = vld [vmem:[#allocation2 + $0x38] sm:$0xff]
    %v71 = vld [vmem:[#allocation2 + $0x40] sm:$0xff]
    %v72 = vld [vmem:[#allocation2 + $0x48] sm:$0xff]
    %v73 = vld [vmem:[#allocation2 + $0x50] sm:$0xff]
    %v74 = vld [vmem:[#allocation2 + $0x58] sm:$0xff]
    %v75 = vld [vmem:[#allocation2 + $0x60] sm:$0xff]
    %v76 = vld [vmem:[#allocation2 + $0x68] sm:$0xff]
    %v77 = vld [vmem:[#allocation2 + $0x70] sm:$0xff]
    %v78 = vld [vmem:[#allocation2 + $0x78] sm:$0xff]
    %v79 = vld [vmem:[#allocation2 + $0x80] sm:$0xff]
    %v80 = vld [vmem:[#allocation2 + $0x88] sm:$0xff]
    %v81 = vld [vmem:[#allocation2 + $0x90] sm:$0xff]
    %v82 = vld [vmem:[#allocation2 + $0x98] sm:$0xff]
    %v83 = vld [vmem:[#allocation2 + $0xa0] sm:$0xff]
    %v84 = vld [vmem:[#allocation2 + $0xa8] sm:$0xff]
    %v85 = vld [vmem:[#allocation2 + $0xb0] sm:$0xff]
    %v86 = vld [vmem:[#allocation2 + $0xb8] sm:$0xff]
    %v87 = vld [vmem:[#allocation2 + $0xc0] sm:$0xff]
    %v88 = vld [vmem:[#allocation2 + $0xc8] sm:$0xff]
    %v89 = vld [vmem:[#allocation2 + $0xd0] sm:$0xff]
    %v90 = vld [vmem:[#allocation2 + $0xd8] sm:$0xff]
    %v91 = vld [vmem:[#allocation2 + $0xe0] sm:$0xff]
    %v92 = vld [vmem:[#allocation2 + $0xe8] sm:$0xff]
    %v93 = vld [vmem:[#allocation2 + $0xf0] sm:$0xff]
    %v94 = vld [vmem:[#allocation2 + $0xf8] sm:$0xff]
    %v95 = vld [vmem:[#allocation2 + $0x100] sm:$0xff]
    %v96 = vld [vmem:[#allocation2 + $0x108] sm:$0xff]
    %v97 = vld [vmem:[#allocation2 + $0x110] sm:$0xff]
    %v98 = vld [vmem:[#allocation2 + $0x118] sm:$0xff]
    %v99 = vld [vmem:[#allocation2 + $0x120] sm:$0xff]
    %v100 = vld [vmem:[#allocation2 + $0x128] sm:$0xff]
    %v101 = vld [vmem:[#allocation2 + $0x130] sm:$0xff]
    %v102 = vld [vmem:[#allocation2 + $0x138] sm:$0xff]
    %v103 = vld [vmem:[#allocation2 + $0x140] sm:$0xff]
    %v104 = vld [vmem:[#allocation2 + $0x148] sm:$0xff]
    %v105 = vld [vmem:[#allocation2 + $0x150] sm:$0xff]
    %v106 = vld [vmem:[#allocation2 + $0x158] sm:$0xff]
    %v107 = vld [vmem:[#allocation2 + $0x160] sm:$0xff]
    %v108 = vld [vmem:[#allocation2 + $0x168] sm:$0xff]
    %v109 = vld [vmem:[#allocation2 + $0x170] sm:$0xff]
    %v110 = vld [vmem:[#allocation2 + $0x178] sm:$0xff]
    %v111 = vld [vmem:[#allocation2 + $0x180] sm:$0xff]
    %v112 = vld [vmem:[#allocation2 + $0x188] sm:$0xff]
    %v113 = vld [vmem:[#allocation2 + $0x190] sm:$0xff]
    %v114 = vld [vmem:[#allocation2 + $0x198] sm:$0xff]
    %v115 = vld [vmem:[#allocation2 + $0x1a0] sm:$0xff]
    %v116 = vld [vmem:[#allocation2 + $0x1a8] sm:$0xff]
    %v117 = vld [vmem:[#allocation2 + $0x1b0] sm:$0xff]
    %v118 = vld [vmem:[#allocation2 + $0x1b8] sm:$0xff]
    %v119 = vld [vmem:[#allocation2 + $0x1c0] sm:$0xff]
    %v120 = vld [vmem:[#allocation2 + $0x1c8] sm:$0xff]
    %v121 = vld [vmem:[#allocation2 + $0x1d0] sm:$0xff]
    %v122 = vld [vmem:[#allocation2 + $0x1d8] sm:$0xff]
    %v123 = vld [vmem:[#allocation2 + $0x1e0] sm:$0xff]
    %v124 = vld [vmem:[#allocation2 + $0x1e8] sm:$0xff]
    %v125 = vld [vmem:[#allocation2 + $0x1f0] sm:$0xff]
    %v126 = vld [vmem:[#allocation2 + $0x1f8] sm:$0xff]
    %v127 = vld [vmem:[%s2] sm:$0xf]
    %v129 = vlaneseq
    %v130 = vshrl.u32 %v129, 7
    %v131 = vsub.s32 0, %v130
    %v132 = vrot.slane %v127, %v131
    %v133 = vlaneseq
    %v134 = vshrl.u32 %v133, 7
    %v135 = vsub.s32 1, %v134
    %v136 = vrot.slane %v127, %v135
    %v137 = vlaneseq
    %v138 = vshrl.u32 %v137, 7
    %v139 = vsub.s32 2, %v138
    %v140 = vrot.slane %v127, %v139
    %v141 = vlaneseq
    %v142 = vshrl.u32 %v141, 7
    %v143 = vsub.s32 3, %v142
    %v144 = vrot.slane %v127, %v143
    %149 = vmatprep.subr.mxu0 %v124
    %150 = vmatpush1.msra.mxu0 %v123
    %151 = vmatprep.subr.mxu0 %v120
    %152 = vmatpush1.msra.mxu0 %v119
    %153 = vmatprep.subr.mxu0 %v116
    %154 = vmatpush1.msra.mxu0 %v115
    %155 = vmatprep.subr.mxu0 %v112
    %156 = vmatpush1.msra.mxu0 %v111
    %157 = vmatprep.subr.mxu0 %v108
    %158 = vmatpush1.msra.mxu0 %v107
    %159 = vmatprep.subr.mxu0 %v104
    %160 = vmatpush1.msra.mxu0 %v103
    %161 = vmatprep.subr.mxu0 %v100
    %162 = vmatpush1.msra.mxu0 %v99
    %163 = vmatprep.subr.mxu0 %v96
    %164 = vmatpush1.msra.mxu0 %v95
    %165 = vmatprep.subr.mxu0 %v92
    %166 = vmatpush1.msra.mxu0 %v91
    %167 = vmatprep.subr.mxu0 %v88
    %168 = vmatpush1.msra.mxu0 %v87
    %169 = vmatprep.subr.mxu0 %v84
    %170 = vmatpush1.msra.mxu0 %v83
    %171 = vmatprep.subr.mxu0 %v80
    %172 = vmatpush1.msra.mxu0 %v79
    %173 = vmatprep.subr.mxu0 %v76
    %174 = vmatpush1.msra.mxu0 %v75
    %175 = vmatprep.subr.mxu0 %v72
    %176 = vmatpush1.msra.mxu0 %v71
    %177 = vmatprep.subr.mxu0 %v68
    %178 = vmatpush1.msra.mxu0 %v67
    %179 = vmatprep.subr.mxu0 %v64
    %180 = vmatpush1.msra.mxu0 %v63
    %181 = vmatprep.subr.mxu0 0.0
    %182 = vmatpush2.msra.mxu0 0.0
    %183 = vmatprep.subr.mxu0 0.0
    %184 = vmatpush2.msra.mxu0 0.0
    %185 = vmatprep.subr.mxu0 0.0
    %186 = vmatpush2.msra.mxu0 0.0
    %187 = vmatprep.subr.mxu0 0.0
    %188 = vmatpush2.msra.mxu0 0.0
    %189 = vmatprep.subr.mxu0 0.0
    %190 = vmatpush2.msra.mxu0 0.0
    %191 = vmatprep.subr.mxu0 0.0
    %192 = vmatpush2.msra.mxu0 0.0
    %193 = vmatprep.subr.mxu0 0.0
    %194 = vmatpush2.msra.mxu0 0.0
    %195 = vmatprep.subr.mxu0 0.0
    %196 = vmatpush2.msra.mxu0 0.0
    %197 = vmatprep.subr.mxu0 0.0
    %198 = vmatpush2.msra.mxu0 0.0
    %199 = vmatprep.subr.mxu0 0.0
    %200 = vmatpush2.msra.mxu0 0.0
    %201 = vmatprep.subr.mxu0 0.0
    %202 = vmatpush2.msra.mxu0 0.0
    %203 = vmatprep.subr.mxu0 0.0
    %204 = vmatpush2.msra.mxu0 0.0
    %205 = vmatprep.subr.mxu0 0.0
    %206 = vmatpush2.msra.mxu0 0.0
    %207 = vmatprep.subr.mxu0 0.0
    %208 = vmatpush2.msra.mxu0 0.0
    %209 = vmatprep.subr.mxu0 0.0
    %210 = vmatpush2.msra.mxu0 0.0
    %211 = vmatprep.subr.mxu0 0.0
    %212 = vmatpush2.msra.mxu0 0.0
    %213 = vmatprep.mubr.f32.mxu0 0.0
    %214 = vmatmul.mubr.f32.gmra.mxu0 %v62
    %v215 = vpop.f32.mrf.mxu0
    %v216 = vadd.f32 %v132, %v215
    %v217 = vpop.f32.mrf.mxu0
    %v218 = vadd.f32 %v136, %v217
    %219 = vdwg.mxu0
    %220 = vmatprep.subr.mxu0 %v126
    %221 = vmatpush1.msra.mxu0 %v125
    %222 = vmatprep.subr.mxu0 %v122
    %223 = vmatpush1.msra.mxu0 %v121
    %224 = vmatprep.subr.mxu0 %v118
    %225 = vmatpush1.msra.mxu0 %v117
    %226 = vmatprep.subr.mxu0 %v114
    %227 = vmatpush1.msra.mxu0 %v113
    %228 = vmatprep.subr.mxu0 %v110
    %229 = vmatpush1.msra.mxu0 %v109
    %230 = vmatprep.subr.mxu0 %v106
    %231 = vmatpush1.msra.mxu0 %v105
    %232 = vmatprep.subr.mxu0 %v102
    %233 = vmatpush1.msra.mxu0 %v101
    %234 = vmatprep.subr.mxu0 %v98
    %235 = vmatpush1.msra.mxu0 %v97
    %236 = vmatprep.subr.mxu0 %v94
    %237 = vmatpush1.msra.mxu0 %v93
    %238 = vmatprep.subr.mxu0 %v90
    %239 = vmatpush1.msra.mxu0 %v89
    %240 = vmatprep.subr.mxu0 %v86
    %241 = vmatpush1.msra.mxu0 %v85
    %242 = vmatprep.subr.mxu0 %v82
    %243 = vmatpush1.msra.mxu0 %v81
    %244 = vmatprep.subr.mxu0 %v78
    %245 = vmatpush1.msra.mxu0 %v77
    %246 = vmatprep.subr.mxu0 %v74
    %247 = vmatpush1.msra.mxu0 %v73
    %248 = vmatprep.subr.mxu0 %v70
    %249 = vmatpush1.msra.mxu0 %v69
    %250 = vmatprep.subr.mxu0 %v66
    %251 = vmatpush1.msra.mxu0 %v65
    %252 = vmatprep.subr.mxu0 0.0
    %253 = vmatpush2.msra.mxu0 0.0
    %254 = vmatprep.subr.mxu0 0.0
    %255 = vmatpush2.msra.mxu0 0.0
    %256 = vmatprep.subr.mxu0 0.0
    %257 = vmatpush2.msra.mxu0 0.0
    %258 = vmatprep.subr.mxu0 0.0
    %259 = vmatpush2.msra.mxu0 0.0
    %260 = vmatprep.subr.mxu0 0.0
    %261 = vmatpush2.msra.mxu0 0.0
    %262 = vmatprep.subr.mxu0 0.0
    %263 = vmatpush2.msra.mxu0 0.0
    %264 = vmatprep.subr.mxu0 0.0
    %265 = vmatpush2.msra.mxu0 0.0
    %266 = vmatprep.subr.mxu0 0.0
    %267 = vmatpush2.msra.mxu0 0.0
    %268 = vmatprep.subr.mxu0 0.0
    %269 = vmatpush2.msra.mxu0 0.0
    %270 = vmatprep.subr.mxu0 0.0
    %271 = vmatpush2.msra.mxu0 0.0
    %272 = vmatprep.subr.mxu0 0.0
    %273 = vmatpush2.msra.mxu0 0.0
    %274 = vmatprep.subr.mxu0 0.0
    %275 = vmatpush2.msra.mxu0 0.0
    %276 = vmatprep.subr.mxu0 0.0
    %277 = vmatpush2.msra.mxu0 0.0
    %278 = vmatprep.subr.mxu0 0.0
    %279 = vmatpush2.msra.mxu0 0.0
    %280 = vmatprep.subr.mxu0 0.0
    %281 = vmatpush2.msra.mxu0 0.0
    %282 = vmatprep.subr.mxu0 0.0
    %283 = vmatpush2.msra.mxu0 0.0
    %284 = vmatprep.mubr.f32.mxu0 0.0
    %285 = vmatmul.mubr.f32.gmra.mxu0 %v62
    %v286 = vpop.f32.mrf.mxu0
    %v287 = vadd.f32 %v140, %v286
    %v288 = vpop.f32.mrf.mxu0
    %v289 = vadd.f32 %v144, %v288
    %290 = vdwg.mxu0
    %291 = vst [vmem:[#allocation5] sm:$0xff] %v216
    %292 = vst [vmem:[#allocation5 + $0x8] sm:$0xff] %v218
    %293 = vst [vmem:[#allocation5 + $0x10] sm:$0xff] %v287
    %294 = vst [vmem:[#allocation5 + $0x18] sm:$0xff] %v289
    // Predicated region
    $region18: #{tpu_custom_call.1} parent=1 // pred_check
      _
    $region19: #{tpu_custom_call.1} parent=1 // pred_check_branch
      %296 = sbr.rel (0) target = $region21
    $region20: #{tpu_custom_call.1} parent=1 // pred_region
      %s298 = ssub.s32 512, 512
      %299 = vsyncadd [#allocation4], %s298
      %s301 = sshll.u32 [#allocation5], 4
      %s302 = int_to_ptr.vmem [resolvable:$true] %s301
      %304 = dma.vmem_to_hbm [thread:$0]  %s302, 512, %s3, [#allocation4]
    $region21: #{tpu_custom_call.1} parent=1 // pred_fallthru
      _
    // Predicated region
    $region22: #{tpu_custom_call.1} parent=1 // pred_check
      _
    $region23: #{tpu_custom_call.1} parent=1 // pred_check_branch
      %306 = sbr.rel (0) target = $region25
    $region24: #{tpu_custom_call.1} parent=1 // pred_region
      %307 = dma.done [#allocation4], 512
    $region25: #{tpu_custom_call.1} parent=1 // pred_fallthru
      _
    %308 = vsyncpa [#allocation3], 1
    %309 = vsyncpa [#allocation4], 1

</llo_original>
